<compile_context>
chip_gen: v5e
topology: v5e:2x2
jax: 0.10.0
libtpu: 0.0.40
codegen_flags: <defaults>
</compile_context>

<pallas_src>
import functools

import jax
import jax.numpy as jnp
from jax.experimental import pallas as pl
from jax.experimental.pallas import tpu as pltpu

LANE = 128
SUBLANE = 8


def _round_up(x, m):
    return ((x + m - 1) // m) * m


def actor_critic_kernel(xT_ref, w1T_ref, b1_ref, w2T_ref, b2_ref, out_ref, *,
                        num_outputs):
    xT = xT_ref[...]                                                   # [F, TM] bf16

    # ----- fused layer 1 (critic || actor), transposed: one MXU op + ReLU -----
    h = jnp.dot(w1T_ref[...], xT, preferred_element_type=jnp.float32)  # [2H, TM] f32
    h = jnp.maximum(h + b1_ref[...], 0.0)

    # ----- fused layer 2 (block-diagonal, transposed) -----
    # row 0 = critic value, rows 1..A = actor logits, rows A+1.. = zero pad.
    out = jnp.dot(w2T_ref[...], h.astype(w2T_ref.dtype),
                  preferred_element_type=jnp.float32) + b2_ref[...]    # [8, TM] f32

    row = jax.lax.broadcasted_iota(jnp.int32, out.shape, 0)
    is_value = row == 0
    is_logit = (row >= 1) & (row <= num_outputs)

    # Per-batch-column stable softmax over the actor rows only.
    logits = jnp.where(is_logit, out, -jnp.inf)
    m = jnp.max(logits, axis=0, keepdims=True)
    e = jnp.exp(logits - m)                         # masked rows -> exp(-inf) = 0
    denom = jnp.sum(e, axis=0, keepdims=True)
    probs = e / denom                               # exact divide: rows sum to 1

    # Packed output, lane-dense along batch: [value ; probs ; zeros] on sublanes.
    packed = jnp.where(is_value, out, probs)
    out_ref[...] = packed.astype(out_ref.dtype)


def _choose_batch_tile(batch, block_batch):
    """Big tiles (kernel is overhead/DMA-bound), but aim for >=2 grid steps when
    the batch is large enough so the 'parallel' axis shards across v7x's two
    TensorCores. The lane (batch) tile must be a multiple of 128 or the full
    batch (Pallas (8,128) block constraint)."""
    if batch <= 2 * LANE:
        return batch                                  # single full-batch tile
    half = _round_up(pl.cdiv(batch, 2), LANE)
    return min(block_batch, half)


def actor_critic_forward(x, params, *, block_batch=8192):
    """Fused ActorCritic forward. x: [B, num_inputs] f32. Returns (probs, value)."""
    B, F = x.shape
    w1T, b1, w2T, b2 = params["w1T"], params["b1"], params["w2T"], params["b2"]
    num_outputs = params["num_outputs"]
    H2 = w1T.shape[0]                    # 2 * hidden
    out_sub = w2T.shape[0]               # 1 + num_outputs, padded to 8 sublanes

    xT = x.T.astype(jnp.bfloat16)        # [F, B]: batch on the lane axis

    tm = _choose_batch_tile(B, block_batch)
    grid = (pl.cdiv(B, tm),)

    flops = 2 * B * (F * H2 + H2 * out_sub)
    bytes_accessed = (2 * (xT.size + w1T.size + w2T.size)        # bf16 streams
                      + 4 * (b1.size + b2.size + B * out_sub))   # f32 biases + output
    cost = pl.CostEstimate(flops=flops,
                           transcendentals=B * out_sub,
                           bytes_accessed=bytes_accessed)

    kernel = functools.partial(actor_critic_kernel, num_outputs=num_outputs)

    packedT = pl.pallas_call(
        kernel,
        out_shape=jax.ShapeDtypeStruct((out_sub, B), jnp.float32),
        grid_spec=pltpu.PrefetchScalarGridSpec(
            num_scalar_prefetch=0,
            grid=grid,
            in_specs=[
                pl.BlockSpec((F, tm), lambda i: (0, i)),        # x^T: tiled over batch lanes
                pl.BlockSpec((H2, F), lambda i: (0, 0)),        # W1^T (VMEM-resident)
                pl.BlockSpec((H2, 1), lambda i: (0, 0)),        # b1   (resident)
                pl.BlockSpec((out_sub, H2), lambda i: (0, 0)),  # W2^T (resident)
                pl.BlockSpec((out_sub, 1), lambda i: (0, 0)),   # b2   (resident)
            ],
            out_specs=pl.BlockSpec((out_sub, tm), lambda i: (0, i)),
        ),
        compiler_params=pltpu.CompilerParams(
            dimension_semantics=("parallel",)),
        cost_estimate=cost,
    )(xT, w1T, b1, w2T, b2)

    value = packedT[0:1, :].T                          # [B, 1]
    probs = packedT[1:1 + num_outputs, :].T            # [B, num_outputs]
    return probs, value


def init_params(key, num_inputs, num_outputs, hidden_size):
    """Per-head params mimicking nn.Linear default init: U(+-1/sqrt(fan_in)).
    Weights stored as (in, out) = transpose of PyTorch's (out, in)."""
    def linear(k, fan_in, fan_out):
        kw, kb = jax.random.split(k)
        bound = 1.0 / jnp.sqrt(jnp.float32(fan_in))
        w = jax.random.uniform(kw, (fan_in, fan_out), jnp.float32, -bound, bound)
        b = jax.random.uniform(kb, (1, fan_out), jnp.float32, -bound, bound)
        return w, b

    k1, k2, k3, k4 = jax.random.split(key, 4)
    cw1, cb1 = linear(k1, num_inputs, hidden_size)
    cw2, cb2 = linear(k2, hidden_size, 1)
    aw1, ab1 = linear(k3, num_inputs, hidden_size)
    aw2, ab2 = linear(k4, hidden_size, num_outputs)
    return dict(cw1=cw1, cb1=cb1, cw2=cw2, cb2=cb2,
                aw1=aw1, ab1=ab1, aw2=aw2, ab2=ab2)


def pack_params(raw):
    """Fuse per-head params into the kernel's packed, transposed layout."""
    cw1, cb1, cw2, cb2 = raw["cw1"], raw["cb1"], raw["cw2"], raw["cb2"]
    aw1, ab1, aw2, ab2 = raw["aw1"], raw["ab1"], raw["aw2"], raw["ab2"]
    F, H = cw1.shape
    A = aw2.shape[1]
    out_sub = _round_up(1 + A, SUBLANE)

    # Fused layer 1, transposed: (2H, F). bf16 weights -> native MXU format,
    # half the DMA bytes. Biases stay f32 (added after the f32-accumulated dot).
    w1T = jnp.concatenate([cw1, aw1], axis=1).T                  # (2H, F)
    b1 = jnp.concatenate([cb1, ab1], axis=1).T                   # (2H, 1)

    # Block-diagonal layer 2, transposed: (out_sub, 2H).
    w2T = jnp.zeros((out_sub, 2 * H), jnp.float32)
    w2T = w2T.at[0:1, :H].set(cw2.T)                             # critic row
    w2T = w2T.at[1:1 + A, H:].set(aw2.T)                         # actor rows
    b2 = jnp.zeros((out_sub, 1), jnp.float32)
    b2 = b2.at[0:1, :].set(cb2.T)
    b2 = b2.at[1:1 + A, :].set(ab2.T)

    return dict(w1T=w1T.astype(jnp.bfloat16), b1=b1,
                w2T=w2T.astype(jnp.bfloat16), b2=b2,
                num_outputs=A)


if __name__ == "__main__":
    # Small shapes implied by the forward: x is [batch, num_inputs].
    batch, num_inputs, num_outputs, hidden_size = 8, 16, 4, 32

    key = jax.random.PRNGKey(0)
    kx, kp = jax.random.split(key)
    x = jax.random.normal(kx, (batch, num_inputs), jnp.float32)
    raw = init_params(kp, num_inputs, num_outputs, hidden_size)
    params = pack_params(raw)

    probs, value = actor_critic_forward(x, params)
    probs, value = jax.block_until_ready(probs), jax.block_until_ready(value)

    # Reference: unfused f32 math mirroring the PyTorch module.
    h_c = jnp.maximum(x @ raw["cw1"] + raw["cb1"], 0.0)
    value_ref = h_c @ raw["cw2"] + raw["cb2"]
    h_a = jnp.maximum(x @ raw["aw1"] + raw["ab1"], 0.0)
    probs_ref = jax.nn.softmax(h_a @ raw["aw2"] + raw["ab2"], axis=1)

    assert value.shape == (batch, 1)
    assert probs.shape == (batch, num_outputs)
    # bf16 MXU inputs (with f32 accumulation) -> small absolute error vs f32 ref.
    assert jnp.allclose(value, value_ref, atol=3e-2), float(jnp.max(jnp.abs(value - value_ref)))
    assert jnp.allclose(probs, probs_ref, atol=2e-2), float(jnp.max(jnp.abs(probs - probs_ref)))
    # Exact softmax division: rows normalize to 1 within f32 rounding.
    assert jnp.allclose(jnp.sum(probs, axis=1), 1.0, atol=1e-5)

    print("KERNEL_OK")
</pallas_src>

<mosaic_0001>
module attributes {stable_mosaic.version = 11 : i64} {
  func.func @actor_critic_kernel(%arg0: i32, %arg1: memref<16x8xbf16, #tpu.memory_space<vmem>>, %arg2: memref<64x16xbf16, #tpu.memory_space<vmem>>, %arg3: memref<64x1xf32, #tpu.memory_space<vmem>>, %arg4: memref<8x64xbf16, #tpu.memory_space<vmem>>, %arg5: memref<8x1xf32, #tpu.memory_space<vmem>>, %arg6: memref<8x8xf32, #tpu.memory_space<vmem>>) attributes {dimension_semantics = [#tpu.dimension_semantics<parallel>], iteration_bounds = array<i64: 1>, scalar_prefetch = 0 : i64, scratch_operands = 0 : i64, tpu.core_type = #tpu.core_type<tc>, window_params = [{transform_indices = @transform_0, window_bounds = array<i64: 16, 8>}, {pipeline_mode = #tpu.pipeline_mode<synchronous>, transform_indices = @transform_1, window_bounds = array<i64: 64, 16>}, {pipeline_mode = #tpu.pipeline_mode<synchronous>, transform_indices = @transform_2, window_bounds = array<i64: 64, 1>}, {pipeline_mode = #tpu.pipeline_mode<synchronous>, transform_indices = @transform_3, window_bounds = array<i64: 8, 64>}, {pipeline_mode = #tpu.pipeline_mode<synchronous>, transform_indices = @transform_4, window_bounds = array<i64: 8, 1>}, {transform_indices = @transform_5, window_bounds = array<i64: 8, 8>}]} {
    %c0 = arith.constant 0 : index
    %c0_0 = arith.constant 0 : index
    %0 = vector.load %arg1[%c0, %c0_0] : memref<16x8xbf16, #tpu.memory_space<vmem>>, vector<16x8xbf16>
    %c0_1 = arith.constant 0 : index
    %c0_2 = arith.constant 0 : index
    %1 = vector.load %arg2[%c0_1, %c0_2] : memref<64x16xbf16, #tpu.memory_space<vmem>>, vector<64x16xbf16>
    %cst = arith.constant dense<0.000000e+00> : vector<64x8xf32>
    %2 = tpu.matmul %1, %0, %cst {dimension_numbers = #tpu.dot_dimension_numbers<[1], [0], [0], [1], [0, 0, 1, 1], [], []>} : vector<64x16xbf16>, vector<16x8xbf16>, vector<64x8xf32> -> vector<64x8xf32>
    %c0_3 = arith.constant 0 : index
    %c0_4 = arith.constant 0 : index
    %3 = vector.load %arg3[%c0_3, %c0_4] : memref<64x1xf32, #tpu.memory_space<vmem>>, vector<64x1xf32>
    %4 = vector.broadcast %3 : vector<64x1xf32> to vector<64x8xf32>
    %5 = arith.addf %2, %4 : vector<64x8xf32>
    %cst_5 = arith.constant 0.000000e+00 : f32
    %6 = vector.broadcast %cst_5 : f32 to vector<64x8xf32>
    %7 = arith.maximumf %5, %6 : vector<64x8xf32>
    %c0_6 = arith.constant 0 : index
    %c0_7 = arith.constant 0 : index
    %8 = vector.load %arg4[%c0_6, %c0_7] : memref<8x64xbf16, #tpu.memory_space<vmem>>, vector<8x64xbf16>
    %9 = arith.truncf %7 : vector<64x8xf32> to vector<64x8xbf16>
    %cst_8 = arith.constant dense<0.000000e+00> : vector<8x8xf32>
    %10 = tpu.matmul %8, %9, %cst_8 {dimension_numbers = #tpu.dot_dimension_numbers<[1], [0], [0], [1], [0, 0, 1, 1], [], []>} : vector<8x64xbf16>, vector<64x8xbf16>, vector<8x8xf32> -> vector<8x8xf32>
    %c0_9 = arith.constant 0 : index
    %c0_10 = arith.constant 0 : index
    %11 = vector.load %arg5[%c0_9, %c0_10] : memref<8x1xf32, #tpu.memory_space<vmem>>, vector<8x1xf32>
    %12 = vector.broadcast %11 : vector<8x1xf32> to vector<8x8xf32>
    %13 = arith.addf %10, %12 : vector<8x8xf32>
    %14 = tpu.iota {dimensions = array<i32: 0>} : vector<8x8xi32>
    %c0_i32 = arith.constant 0 : i32
    %15 = vector.broadcast %c0_i32 : i32 to vector<8x8xi32>
    %16 = arith.cmpi eq, %14, %15 : vector<8x8xi32>
    %c1_i32 = arith.constant 1 : i32
    %17 = vector.broadcast %c1_i32 : i32 to vector<8x8xi32>
    %18 = arith.cmpi sge, %14, %17 : vector<8x8xi32>
    %c4_i32 = arith.constant 4 : i32
    %19 = vector.broadcast %c4_i32 : i32 to vector<8x8xi32>
    %20 = arith.cmpi sle, %14, %19 : vector<8x8xi32>
    %21 = arith.andi %18, %20 : vector<8x8xi1>
    %cst_11 = arith.constant 0xFF800000 : f32
    %22 = vector.broadcast %cst_11 : f32 to vector<8x8xf32>
    %23 = arith.select %21, %13, %22 : vector<8x8xi1>, vector<8x8xf32>
    %cst_12 = arith.constant dense<0xFF800000> : vector<8xf32>
    %24 = vector.multi_reduction <maximumf>, %23, %cst_12 [0] : vector<8x8xf32> to vector<8xf32>
    %25 = vector.shape_cast %24 : vector<8xf32> to vector<1x8xf32>
    %26 = vector.broadcast %25 : vector<1x8xf32> to vector<8x8xf32>
    %27 = arith.subf %23, %26 : vector<8x8xf32>
    %28 = math.exp %27 : vector<8x8xf32>
    %cst_13 = arith.constant dense<0.000000e+00> : vector<8xf32>
    %29 = vector.multi_reduction <add>, %28, %cst_13 [0] : vector<8x8xf32> to vector<8xf32>
    %30 = vector.shape_cast %29 : vector<8xf32> to vector<1x8xf32>
    %31 = vector.broadcast %30 : vector<1x8xf32> to vector<8x8xf32>
    %32 = arith.divf %28, %31 : vector<8x8xf32>
    %33 = arith.select %16, %13, %32 : vector<8x8xi1>, vector<8x8xf32>
    %c0_14 = arith.constant 0 : index
    %c0_15 = arith.constant 0 : index
    %34 = vector.load %arg6[%c0_14, %c0_15] : memref<8x8xf32, #tpu.memory_space<vmem>>, vector<8x8xf32>
    tpu.vector_store %arg6[%c0_14, %c0_15], %33 {strides = array<i32>} : memref<8x8xf32, #tpu.memory_space<vmem>>, vector<8x8xf32>,
    return
  }
  func.func @transform_0(%arg0: i32) -> (i32, i32) {
    %c0_i32 = arith.constant 0 : i32
    %c0_i32_0 = arith.constant 0 : i32
    return %c0_i32, %arg0 : i32, i32
  }
  func.func @transform_1(%arg0: i32) -> (i32, i32) {
    %c0_i32 = arith.constant 0 : i32
    %c0_i32_0 = arith.constant 0 : i32
    %c0_i32_1 = arith.constant 0 : i32
    return %c0_i32, %c0_i32_0 : i32, i32
  }
  func.func @transform_2(%arg0: i32) -> (i32, i32) {
    %c0_i32 = arith.constant 0 : i32
    %c0_i32_0 = arith.constant 0 : i32
    %c0_i32_1 = arith.constant 0 : i32
    return %c0_i32, %c0_i32_0 : i32, i32
  }
  func.func @transform_3(%arg0: i32) -> (i32, i32) {
    %c0_i32 = arith.constant 0 : i32
    %c0_i32_0 = arith.constant 0 : i32
    %c0_i32_1 = arith.constant 0 : i32
    return %c0_i32, %c0_i32_0 : i32, i32
  }
  func.func @transform_4(%arg0: i32) -> (i32, i32) {
    %c0_i32 = arith.constant 0 : i32
    %c0_i32_0 = arith.constant 0 : i32
    %c0_i32_1 = arith.constant 0 : i32
    return %c0_i32, %c0_i32_0 : i32, i32
  }
  func.func @transform_5(%arg0: i32) -> (i32, i32) {
    %c0_i32 = arith.constant 0 : i32
    %c0_i32_0 = arith.constant 0 : i32
    return %c0_i32, %arg0 : i32, i32
  }
}

</mosaic_0001>

<llo_original>
// kernel: tpu_custom_call.1
$region0: #{tpu_custom_call.1}
  #allocation0 [shape = 'u32[]', space=smem, size = 0x4, offset = 0x4, fixed_abs, tag = 'smem constant byte address 0x4 - core index']
  #allocation1 [shape = 'u32[72,128]{1,0:T(1,128)}', space=vmem, size = 0x9000, scoped, tag = 'internal scratch']
  %s0 = inlined_call_operand.vmem [shape: bf16[16,8], index: 0, kind: input, shape index: {}]
  %s1 = inlined_call_operand.vmem [shape: bf16[64,16], index: 1, kind: input, shape index: {}]
  %s2 = inlined_call_operand.vmem [shape: f32[64,1], index: 2, kind: input, shape index: {}]
  %s3 = inlined_call_operand.vmem [shape: bf16[8,64], index: 3, kind: input, shape index: {}]
  %s4 = inlined_call_operand.vmem [shape: f32[8,1], index: 4, kind: input, shape index: {}]
  %s5 = inlined_call_operand.hbm [shape: f32[8,8], index: 5, kind: output, shape index: {}]
  %s6 = sld [smem:[#allocation0]]
  $region30: #{tpu_custom_call.1} parent=0
    _
  %s8 = ssub.s32 1, %s6
  %s9 = scalar_select 0, %s8, %s6
  $region1: #{tpu_custom_call.1} parent=0
    #allocation2 [shape = 'u8[4096]{0}', space=vmem, size = 0x1000, scoped, tag = 'output window, operand 0, single buffered']
    #allocation3 [shape = 's32[1]{0}', space=sflag, size = 0x4, scoped, tag = 'scoped memory for tpu_custom_call.1']
    %10 = vsyncpa [#allocation3], 0
    // Predicated region
    $region2: #{tpu_custom_call.1} parent=1 // pred_check
      _
    $region3: #{tpu_custom_call.1} parent=1 // pred_check_branch
      %12 = sbr.rel (0) target = $region5
    $region4: #{tpu_custom_call.1} parent=1 // pred_region
      _
    $region5: #{tpu_custom_call.1} parent=1 // pred_fallthru
      _
    // Predicated region
    $region6: #{tpu_custom_call.1} parent=1 // pred_check
      _
    $region7: #{tpu_custom_call.1} parent=1 // pred_check_branch
      %14 = sbr.rel (0) target = $region9
    $region8: #{tpu_custom_call.1} parent=1 // pred_region
      _
    $region9: #{tpu_custom_call.1} parent=1 // pred_fallthru
      _
    // Predicated region
    $region10: #{tpu_custom_call.1} parent=1 // pred_check
      _
    $region11: #{tpu_custom_call.1} parent=1 // pred_check_branch
      %16 = sbr.rel (0) target = $region13
    $region12: #{tpu_custom_call.1} parent=1 // pred_region
      _
    $region13: #{tpu_custom_call.1} parent=1 // pred_fallthru
      _
    // Predicated region
    $region14: #{tpu_custom_call.1} parent=1 // pred_check
      _
    $region15: #{tpu_custom_call.1} parent=1 // pred_check_branch
      %18 = sbr.rel (0) target = $region17
    $region16: #{tpu_custom_call.1} parent=1 // pred_region
      _
    $region17: #{tpu_custom_call.1} parent=1 // pred_fallthru
      _
    // Predicated region
    $region18: #{tpu_custom_call.1} parent=1 // pred_check
      _
    $region19: #{tpu_custom_call.1} parent=1 // pred_check_branch
      %20 = sbr.rel (0) target = $region21
    $region20: #{tpu_custom_call.1} parent=1 // pred_region
      _
    $region21: #{tpu_custom_call.1} parent=1 // pred_fallthru
      _
    %v22 = vld [vmem:[%s0] sm:$0xf]
    %v23 = vld [vmem:[%s0 + $0x4] sm:$0xf]
    %v24 = vld [vmem:[%s1] sm:$0xf]
    %v25 = vld [vmem:[%s1 + $0x4] sm:$0xf]
    %v26 = vld [vmem:[%s1 + $0x8] sm:$0xf]
    %v27 = vld [vmem:[%s1 + $0xc] sm:$0xf]
    %v28 = vld [vmem:[%s1 + $0x10] sm:$0xf]
    %v29 = vld [vmem:[%s1 + $0x14] sm:$0xf]
    %v30 = vld [vmem:[%s1 + $0x18] sm:$0xf]
    %v31 = vld [vmem:[%s1 + $0x1c] sm:$0xf]
    %v32 = vld [vmem:[%s2] sm:$0xff]
    %v33 = vld [vmem:[%s2 + $0x8] sm:$0xff]
    %v34 = vld [vmem:[%s2 + $0x10] sm:$0xff]
    %v35 = vld [vmem:[%s2 + $0x18] sm:$0xff]
    %v36 = vld [vmem:[%s2 + $0x20] sm:$0xff]
    %v37 = vld [vmem:[%s2 + $0x28] sm:$0xff]
    %v38 = vld [vmem:[%s2 + $0x30] sm:$0xff]
    %v39 = vld [vmem:[%s2 + $0x38] sm:$0xff]
    %41 = vset.pattern.permute.xlu0 0
    %42 = vperm.xlu0 %41, %v32
    %v43 = vpop.permute.xlu0 %42
    %46 = vset.pattern.permute.xlu0 0
    %47 = vperm.xlu0 %46, %v33
    %v48 = vpop.permute.xlu0 %47
    %51 = vset.pattern.permute.xlu0 0
    %52 = vperm.xlu0 %51, %v34
    %v53 = vpop.permute.xlu0 %52
    %56 = vset.pattern.permute.xlu0 0
    %57 = vperm.xlu0 %56, %v35
    %v58 = vpop.permute.xlu0 %57
    %61 = vset.pattern.permute.xlu0 0
    %62 = vperm.xlu0 %61, %v36
    %v63 = vpop.permute.xlu0 %62
    %66 = vset.pattern.permute.xlu0 0
    %67 = vperm.xlu0 %66, %v37
    %v68 = vpop.permute.xlu0 %67
    %71 = vset.pattern.permute.xlu0 0
    %72 = vperm.xlu0 %71, %v38
    %v73 = vpop.permute.xlu0 %72
    %76 = vset.pattern.permute.xlu0 0
    %77 = vperm.xlu0 %76, %v39
    %v78 = vpop.permute.xlu0 %77
    %v88 = vunpack.c.l.b16 %v24
    %v89 = vunpack.c.l.b16 %v25
    %v90 = vunpack.c.l.b16 %v26
    %v91 = vunpack.c.l.b16 %v27
    %v92 = vunpack.c.l.b16 %v28
    %v93 = vunpack.c.l.b16 %v29
    %v94 = vunpack.c.l.b16 %v30
    %v95 = vunpack.c.l.b16 %v31
    %v96 = vpack.c.b16 %v89, %v88
    %v97 = vpack.c.b16 %v91, %v90
    %v98 = vpack.c.b16 %v93, %v92
    %v99 = vpack.c.b16 %v95, %v94
    %v102 = vunpack.c.l.b16 %v22
    %v103 = vunpack.c.l.b16 %v23
    %v104 = vpack.c.b16 %v103, %v102
    %vm106 = vcmask 130048
    %v108 = vsel %vm106, %v96, 0
    %v111 = vsel %vm106, %v97, 0
    %v114 = vsel %vm106, %v98, 0
    %v117 = vsel %vm106, %v99, 0
    %119 = vmatpush.bf16.msra.mxu0 0
    %120 = vmatpush.bf16.msra.mxu0 0
    %121 = vmatpush.bf16.msra.mxu0 0
    %122 = vmatpush.bf16.msra.mxu0 0
    %123 = vmatpush.bf16.msra.mxu0 0
    %124 = vmatpush.bf16.msra.mxu0 0
    %125 = vmatpush.bf16.msra.mxu0 0
    %126 = vmatpush.bf16.msra.mxu0 %v104
    %127 = vmatmul.bf16.gmra.mxu0 %v108
    %v128 = vpop.f32.mrf.mxu0
    %v129 = vadd.f32 %v43, %v128
    %v130 = vpop.f32.mrf.mxu0
    %v131 = vadd.f32 %v48, %v130
    %132 = vmatmul.bf16.gmra.mxu0 %v111
    %v133 = vpop.f32.mrf.mxu0
    %v134 = vadd.f32 %v53, %v133
    %v135 = vpop.f32.mrf.mxu0
    %v136 = vadd.f32 %v58, %v135
    %137 = vmatmul.bf16.gmra.mxu0 %v114
    %v138 = vpop.f32.mrf.mxu0
    %v139 = vadd.f32 %v63, %v138
    %v140 = vpop.f32.mrf.mxu0
    %v141 = vadd.f32 %v68, %v140
    %142 = vmatmul.bf16.gmra.mxu0 %v117
    %v143 = vpop.f32.mrf.mxu0
    %v144 = vadd.f32 %v73, %v143
    %v145 = vpop.f32.mrf.mxu0
    %v146 = vadd.f32 %v78, %v145
    %147 = vdwg.mxu0
    %v148 = vmax.f32 %v129, 0.0
    %v149 = vmax.f32 %v131, 0.0
    %v150 = vmax.f32 %v134, 0.0
    %v151 = vmax.f32 %v136, 0.0
    %v152 = vmax.f32 %v139, 0.0
    %v153 = vmax.f32 %v141, 0.0
    %v154 = vmax.f32 %v144, 0.0
    %v155 = vmax.f32 %v146, 0.0
    %v156 = vld [vmem:[%s3] sm:$0xf]
    %v157 = vpack.c.bf16 %v149, %v148
    %v158 = vpack.c.bf16 %v151, %v150
    %v159 = vpack.c.bf16 %v153, %v152
    %v160 = vpack.c.bf16 %v155, %v154
    %v161 = vld [vmem:[%s4] sm:$0xff]
    %163 = vset.pattern.permute.xlu0 0
    %164 = vperm.xlu0 %163, %v161
    %v165 = vpop.permute.xlu0 %164
    %vm167 = vcmask 523264
    %v169 = vsel %vm167, %v156, 0
    %171 = vmatpush.bf16.msra.mxu0 0
    %172 = vmatpush.bf16.msra.mxu0 0
    %173 = vmatpush.bf16.msra.mxu0 0
    %174 = vmatpush.bf16.msra.mxu0 0
    %175 = vmatpush.bf16.msra.mxu0 %v160
    %176 = vmatpush.bf16.msra.mxu0 %v159
    %177 = vmatpush.bf16.msra.mxu0 %v158
    %178 = vmatpush.bf16.msra.mxu0 %v157
    %179 = vmatmul.bf16.gmra.mxu0 %v169
    %v180 = vpop.f32.mrf.mxu0
    %v181 = vadd.f32 %v165, %v180
    %v182 = vpop.f32.mrf.mxu0
    %183 = vdwg.mxu0
    %v184 = vlaneseq
    %v185 = vshrl.u32 %v184, 7
    %vm186 = vcmp.eq.s32.totalorder %v185, 0
    %vm187 = vcmp.ge.s32.totalorder %v185, 1
    %vm188 = vcmp.le.s32.totalorder %v185, 4
    %vm189 = vmand %vm187, %vm188
    %v190 = vsel %vm189, %v181, -inf
    %vm191 = vcmask 64512
    %v192 = vsel %vm191, %v190, -inf
    %v193 = vrot.slane %v192, 4
    %v194 = vmax.f32 %v192, %v193
    %v195 = vrot.slane %v194, 2
    %v196 = vmax.f32 %v194, %v195
    %v197 = vrot.slane %v196, 1
    %v198 = vmax.f32 %v196, %v197
    %v199 = vsub.f32 %v190, %v198
    %v200 = vmul.f32 %v199, 1.442695
    %v201 = vpow.pop %v200
    %v202 = vsel %vm191, %v201, 0.0
    %v203 = vrot.slane %v202, 4
    %v204 = vadd.f32 %v202, %v203
    %v205 = vrot.slane %v204, 2
    %v206 = vadd.f32 %v204, %v205
    %v207 = vrot.slane %v206, 1
    %v208 = vadd.f32 %v206, %v207
    %v209 = vrcp.pop %v208
    %v210 = vmul.f32 %v208, %v209
    %v211 = vsub.f32 1.0, %v210
    %v212 = vmul.f32 %v209, %v211
    %v213 = vadd.f32 %v209, %v212
    %vm214 = vweird.f32 %v208
    %vm215 = vweird.f32 %v209
    %vm216 = vmor %vm214, %vm215
    %v217 = vsel %vm216, %v209, %v213
    %v218 = vand.u32 2147483647, %v208
    %vm219 = vcmp.eq.f32.partialorder %v218, 8.507059e+37
    %v220 = vand.u32 %v208, 2147483648
    %v221 = vor.u32 1.1754944e-38, %v220
    %v222 = vsel %vm219, %v221, %v217
    %v223 = vmul.f32 %v201, %v222
    %v224 = vsel %vm186, %v181, %v223
    %225 = vst.msk [vmem:[#allocation2] sm:$0xff] %vm191, %v224
    // Predicated region
    $region22: #{tpu_custom_call.1} parent=1 // pred_check
      _
    $region23: #{tpu_custom_call.1} parent=1 // pred_check_branch
      %227 = sbr.rel (0) target = $region25
    $region24: #{tpu_custom_call.1} parent=1 // pred_region
      %229 = vsyncadd [#allocation3], 0
      %s231 = sshll.u32 [#allocation2], 4
      %s232 = int_to_ptr.vmem [resolvable:$true] %s231
      %s233 = sshll.u32 %s5, 4
      %s234 = int_to_ptr.hbm [resolvable:$true] %s233
      %236 = dma.vmem_to_hbm [thread:$0]  %s232, 128, %s234, [#allocation3]
    $region25: #{tpu_custom_call.1} parent=1 // pred_fallthru
      _
    // Predicated region
    $region26: #{tpu_custom_call.1} parent=1 // pred_check
      _
    $region27: #{tpu_custom_call.1} parent=1 // pred_check_branch
      %238 = sbr.rel (0) target = $region29
    $region28: #{tpu_custom_call.1} parent=1 // pred_region
      %240 = dma.done [#allocation3], 128
    $region29: #{tpu_custom_call.1} parent=1 // pred_fallthru
      _
    %241 = vsyncpa [#allocation3], 1

</llo_original>
